<compile_context>
chip_gen: v6e
topology: v6e:2x2x1
jax: 0.10.0
libtpu: 0.0.40
codegen_flags: <defaults>
</compile_context>

<pallas_src>
import jax
import jax.numpy as jnp
from jax.experimental import pallas as pl
from jax.experimental.pallas import tpu as pltpu

LANE = 128


def _round_up(n, m):
    return ((n + m - 1) // m) * m


def mlp_kernel(x_ref, w1_ref, b1_ref, w2_ref, b2_ref,
               w3_ref, b3_ref, w4_ref, b4_ref, out_ref):
    # bf16 MXU operands, f32 accumulation; bias + ReLU in f32 on the VPU.
    x = x_ref[...].astype(jnp.bfloat16)
    h = jnp.dot(x, w1_ref[...], preferred_element_type=jnp.float32)
    h = jnp.maximum(h + b1_ref[...], 0.0)
    h = jnp.dot(h.astype(jnp.bfloat16), w2_ref[...],
                preferred_element_type=jnp.float32)
    h = jnp.maximum(h + b2_ref[...], 0.0)
    h = jnp.dot(h.astype(jnp.bfloat16), w3_ref[...],
                preferred_element_type=jnp.float32)
    h = jnp.maximum(h + b3_ref[...], 0.0)
    o = jnp.dot(h.astype(jnp.bfloat16), w4_ref[...],
                preferred_element_type=jnp.float32)
    out_ref[...] = (o + b4_ref[...]).astype(out_ref.dtype)


def neural_net_forward(x, params, *, tile_b=2048):
    """x: (B, input_size) float32 (unpadded). params: see init_params."""
    B, in_features = x.shape
    output_size = params["w4"].shape[1]

    # Clamp tile so the batch grid has >= 2 steps when B allows it (v7x megacore);
    # keep it a multiple of 8 sublanes.
    half = _round_up(max(-(-B // 2), 8), 8)
    tile_b = max(8, min(tile_b, half))
    grid = (pl.cdiv(B, tile_b),)

    vmem = pltpu.MemorySpace.VMEM

    def batched(feat):
        # Tiled along the batch grid axis; feature dim is the full array dim.
        return pl.BlockSpec((tile_b, feat), lambda i: (i, 0), memory_space=vmem)

    def resident(shape):
        # Same (only) block every grid step: weights/biases stay VMEM-resident.
        return pl.BlockSpec(shape, lambda i: (0,) * len(shape), memory_space=vmem)

    operands = (
        x,
        params["w1"], params["b1"],
        params["w2"], params["b2"],
        params["w3"], params["b3"],
        params["w4"], params["b4"],
    )
    in_specs = [batched(in_features)] + [resident(op.shape) for op in operands[1:]]

    return pl.pallas_call(
        mlp_kernel,
        out_shape=jax.ShapeDtypeStruct((B, output_size), jnp.float32),
        grid=grid,
        in_specs=in_specs,
        out_specs=batched(output_size),
        compiler_params=pltpu.CompilerParams(
            dimension_semantics=("parallel",)),
    )(*operands)


def init_params(key, input_size, output_size):
    """PyTorch nn.Linear default init (U[-1/sqrt(fan_in), 1/sqrt(fan_in)]) on the
    logical dims. Weights are stored transposed relative to PyTorch ((in, out)),
    hidden dims zero-padded to 128 lanes, input/output dims kept logical.
    Weights bf16, biases f32 as (1, out)."""
    dims = [(input_size, 100), (100, 100), (100, 40), (40, output_size)]
    # Padded storage sizes: only hidden dims go to 128.
    pad_in = [input_size, LANE, LANE, LANE]
    pad_out = [LANE, LANE, LANE, output_size]
    params = {}
    for idx, ((fan_in, fan_out), ip, op) in enumerate(zip(dims, pad_in, pad_out),
                                                      start=1):
        key, kw, kb = jax.random.split(key, 3)
        bound = 1.0 / (fan_in ** 0.5)
        w = jax.random.uniform(kw, (fan_in, fan_out), jnp.float32, -bound, bound)
        b = jax.random.uniform(kb, (fan_out,), jnp.float32, -bound, bound)
        w_p = jnp.zeros((ip, op), jnp.float32).at[:fan_in, :fan_out].set(w)
        b_p = jnp.zeros((1, op), jnp.float32).at[0, :fan_out].set(b)
        params[f"w{idx}"] = w_p.astype(jnp.bfloat16)
        params[f"b{idx}"] = b_p
    return params


def reference_forward(x, params):
    """Pure-JAX reference mirroring the kernel numerics (bf16 matmul operands,
    f32 accumulation, f32 bias/ReLU) on the same parameters."""
    h = jnp.maximum(jnp.dot(x.astype(jnp.bfloat16), params["w1"],
                            preferred_element_type=jnp.float32) + params["b1"], 0.0)
    h = jnp.maximum(jnp.dot(h.astype(jnp.bfloat16), params["w2"],
                            preferred_element_type=jnp.float32) + params["b2"], 0.0)
    h = jnp.maximum(jnp.dot(h.astype(jnp.bfloat16), params["w3"],
                            preferred_element_type=jnp.float32) + params["b3"], 0.0)
    return jnp.dot(h.astype(jnp.bfloat16), params["w4"],
                   preferred_element_type=jnp.float32) + params["b4"]


if __name__ == "__main__":
    key = jax.random.PRNGKey(0)
    batch, input_size, output_size = 8, 8, 4

    key, kx = jax.random.split(key)
    x = jax.random.normal(kx, (batch, input_size), jnp.float32)
    params = init_params(key, input_size, output_size)

    out = neural_net_forward(x, params)
    out = jax.block_until_ready(out)

    ref = reference_forward(x, params)
    assert out.shape == (batch, output_size), out.shape
    assert jnp.allclose(out, ref, atol=1e-3, rtol=1e-3), (
        f"max abs err {jnp.max(jnp.abs(out - ref))}")

    print("KERNEL_OK")
</pallas_src>

<mosaic_0001>
module attributes {stable_mosaic.version = 11 : i64} {
  func.func @mlp_kernel(%arg0: i32, %arg1: memref<8x8xf32, #tpu.memory_space<vmem>>, %arg2: memref<8x128xbf16, #tpu.memory_space<vmem>>, %arg3: memref<1x128xf32, #tpu.memory_space<vmem>>, %arg4: memref<128x128xbf16, #tpu.memory_space<vmem>>, %arg5: memref<1x128xf32, #tpu.memory_space<vmem>>, %arg6: memref<128x128xbf16, #tpu.memory_space<vmem>>, %arg7: memref<1x128xf32, #tpu.memory_space<vmem>>, %arg8: memref<128x4xbf16, #tpu.memory_space<vmem>>, %arg9: memref<1x4xf32, #tpu.memory_space<vmem>>, %arg10: memref<8x4xf32, #tpu.memory_space<vmem>>) attributes {dimension_semantics = [#tpu.dimension_semantics<parallel>], iteration_bounds = array<i64: 1>, scalar_prefetch = 0 : i64, scratch_operands = 0 : i64, tpu.core_type = #tpu.core_type<tc>, window_params = [{transform_indices = @transform_0, window_bounds = array<i64: 8, 8>}, {pipeline_mode = #tpu.pipeline_mode<synchronous>, transform_indices = @transform_1, window_bounds = array<i64: 8, 128>}, {pipeline_mode = #tpu.pipeline_mode<synchronous>, transform_indices = @transform_2, window_bounds = array<i64: 1, 128>}, {pipeline_mode = #tpu.pipeline_mode<synchronous>, transform_indices = @transform_3, window_bounds = array<i64: 128, 128>}, {pipeline_mode = #tpu.pipeline_mode<synchronous>, transform_indices = @transform_4, window_bounds = array<i64: 1, 128>}, {pipeline_mode = #tpu.pipeline_mode<synchronous>, transform_indices = @transform_5, window_bounds = array<i64: 128, 128>}, {pipeline_mode = #tpu.pipeline_mode<synchronous>, transform_indices = @transform_6, window_bounds = array<i64: 1, 128>}, {pipeline_mode = #tpu.pipeline_mode<synchronous>, transform_indices = @transform_7, window_bounds = array<i64: 128, 4>}, {pipeline_mode = #tpu.pipeline_mode<synchronous>, transform_indices = @transform_8, window_bounds = array<i64: 1, 4>}, {transform_indices = @transform_9, window_bounds = array<i64: 8, 4>}]} {
    %c0 = arith.constant 0 : index
    %c0_0 = arith.constant 0 : index
    %0 = vector.load %arg1[%c0, %c0_0] : memref<8x8xf32, #tpu.memory_space<vmem>>, vector<8x8xf32>
    %1 = arith.truncf %0 : vector<8x8xf32> to vector<8x8xbf16>
    %c0_1 = arith.constant 0 : index
    %c0_2 = arith.constant 0 : index
    %2 = vector.load %arg2[%c0_1, %c0_2] : memref<8x128xbf16, #tpu.memory_space<vmem>>, vector<8x128xbf16>
    %cst = arith.constant dense<0.000000e+00> : vector<8x128xf32>
    %3 = tpu.matmul %1, %2, %cst {dimension_numbers = #tpu.dot_dimension_numbers<[1], [0], [0], [1], [0, 0, 1, 1], [], []>} : vector<8x8xbf16>, vector<8x128xbf16>, vector<8x128xf32> -> vector<8x128xf32>
    %c0_3 = arith.constant 0 : index
    %c0_4 = arith.constant 0 : index
    %4 = vector.load %arg3[%c0_3, %c0_4] : memref<1x128xf32, #tpu.memory_space<vmem>>, vector<1x128xf32>
    %5 = vector.broadcast %4 : vector<1x128xf32> to vector<8x128xf32>
    %6 = arith.addf %3, %5 : vector<8x128xf32>
    %cst_5 = arith.constant 0.000000e+00 : f32
    %7 = vector.broadcast %cst_5 : f32 to vector<8x128xf32>
    %8 = arith.maximumf %6, %7 : vector<8x128xf32>
    %9 = arith.truncf %8 : vector<8x128xf32> to vector<8x128xbf16>
    %c0_6 = arith.constant 0 : index
    %c0_7 = arith.constant 0 : index
    %10 = vector.load %arg4[%c0_6, %c0_7] : memref<128x128xbf16, #tpu.memory_space<vmem>>, vector<128x128xbf16>
    %cst_8 = arith.constant dense<0.000000e+00> : vector<8x128xf32>
    %11 = tpu.matmul %9, %10, %cst_8 {dimension_numbers = #tpu.dot_dimension_numbers<[1], [0], [0], [1], [0, 0, 1, 1], [], []>} : vector<8x128xbf16>, vector<128x128xbf16>, vector<8x128xf32> -> vector<8x128xf32>
    %c0_9 = arith.constant 0 : index
    %c0_10 = arith.constant 0 : index
    %12 = vector.load %arg5[%c0_9, %c0_10] : memref<1x128xf32, #tpu.memory_space<vmem>>, vector<1x128xf32>
    %13 = vector.broadcast %12 : vector<1x128xf32> to vector<8x128xf32>
    %14 = arith.addf %11, %13 : vector<8x128xf32>
    %cst_11 = arith.constant 0.000000e+00 : f32
    %15 = vector.broadcast %cst_11 : f32 to vector<8x128xf32>
    %16 = arith.maximumf %14, %15 : vector<8x128xf32>
    %17 = arith.truncf %16 : vector<8x128xf32> to vector<8x128xbf16>
    %c0_12 = arith.constant 0 : index
    %c0_13 = arith.constant 0 : index
    %18 = vector.load %arg6[%c0_12, %c0_13] : memref<128x128xbf16, #tpu.memory_space<vmem>>, vector<128x128xbf16>
    %cst_14 = arith.constant dense<0.000000e+00> : vector<8x128xf32>
    %19 = tpu.matmul %17, %18, %cst_14 {dimension_numbers = #tpu.dot_dimension_numbers<[1], [0], [0], [1], [0, 0, 1, 1], [], []>} : vector<8x128xbf16>, vector<128x128xbf16>, vector<8x128xf32> -> vector<8x128xf32>
    %c0_15 = arith.constant 0 : index
    %c0_16 = arith.constant 0 : index
    %20 = vector.load %arg7[%c0_15, %c0_16] : memref<1x128xf32, #tpu.memory_space<vmem>>, vector<1x128xf32>
    %21 = vector.broadcast %20 : vector<1x128xf32> to vector<8x128xf32>
    %22 = arith.addf %19, %21 : vector<8x128xf32>
    %cst_17 = arith.constant 0.000000e+00 : f32
    %23 = vector.broadcast %cst_17 : f32 to vector<8x128xf32>
    %24 = arith.maximumf %22, %23 : vector<8x128xf32>
    %25 = arith.truncf %24 : vector<8x128xf32> to vector<8x128xbf16>
    %c0_18 = arith.constant 0 : index
    %c0_19 = arith.constant 0 : index
    %26 = vector.load %arg8[%c0_18, %c0_19] : memref<128x4xbf16, #tpu.memory_space<vmem>>, vector<128x4xbf16>
    %cst_20 = arith.constant dense<0.000000e+00> : vector<8x4xf32>
    %27 = tpu.matmul %25, %26, %cst_20 {dimension_numbers = #tpu.dot_dimension_numbers<[1], [0], [0], [1], [0, 0, 1, 1], [], []>} : vector<8x128xbf16>, vector<128x4xbf16>, vector<8x4xf32> -> vector<8x4xf32>
    %c0_21 = arith.constant 0 : index
    %c0_22 = arith.constant 0 : index
    %28 = vector.load %arg9[%c0_21, %c0_22] : memref<1x4xf32, #tpu.memory_space<vmem>>, vector<1x4xf32>
    %29 = vector.broadcast %28 : vector<1x4xf32> to vector<8x4xf32>
    %30 = arith.addf %27, %29 : vector<8x4xf32>
    %c0_23 = arith.constant 0 : index
    %c0_24 = arith.constant 0 : index
    %31 = vector.load %arg10[%c0_23, %c0_24] : memref<8x4xf32, #tpu.memory_space<vmem>>, vector<8x4xf32>
    tpu.vector_store %arg10[%c0_23, %c0_24], %30 {strides = array<i32>} : memref<8x4xf32, #tpu.memory_space<vmem>>, vector<8x4xf32>,
    return
  }
  func.func @transform_0(%arg0: i32) -> (i32, i32) {
    %c0_i32 = arith.constant 0 : i32
    %c0_i32_0 = arith.constant 0 : i32
    return %arg0, %c0_i32 : i32, i32
  }
  func.func @transform_1(%arg0: i32) -> (i32, i32) {
    %c0_i32 = arith.constant 0 : i32
    %c0_i32_0 = arith.constant 0 : i32
    %c0_i32_1 = arith.constant 0 : i32
    return %c0_i32, %c0_i32_0 : i32, i32
  }
  func.func @transform_2(%arg0: i32) -> (i32, i32) {
    %c0_i32 = arith.constant 0 : i32
    %c0_i32_0 = arith.constant 0 : i32
    %c0_i32_1 = arith.constant 0 : i32
    return %c0_i32, %c0_i32_0 : i32, i32
  }
  func.func @transform_3(%arg0: i32) -> (i32, i32) {
    %c0_i32 = arith.constant 0 : i32
    %c0_i32_0 = arith.constant 0 : i32
    %c0_i32_1 = arith.constant 0 : i32
    return %c0_i32, %c0_i32_0 : i32, i32
  }
  func.func @transform_4(%arg0: i32) -> (i32, i32) {
    %c0_i32 = arith.constant 0 : i32
    %c0_i32_0 = arith.constant 0 : i32
    %c0_i32_1 = arith.constant 0 : i32
    return %c0_i32, %c0_i32_0 : i32, i32
  }
  func.func @transform_5(%arg0: i32) -> (i32, i32) {
    %c0_i32 = arith.constant 0 : i32
    %c0_i32_0 = arith.constant 0 : i32
    %c0_i32_1 = arith.constant 0 : i32
    return %c0_i32, %c0_i32_0 : i32, i32
  }
  func.func @transform_6(%arg0: i32) -> (i32, i32) {
    %c0_i32 = arith.constant 0 : i32
    %c0_i32_0 = arith.constant 0 : i32
    %c0_i32_1 = arith.constant 0 : i32
    return %c0_i32, %c0_i32_0 : i32, i32
  }
  func.func @transform_7(%arg0: i32) -> (i32, i32) {
    %c0_i32 = arith.constant 0 : i32
    %c0_i32_0 = arith.constant 0 : i32
    %c0_i32_1 = arith.constant 0 : i32
    return %c0_i32, %c0_i32_0 : i32, i32
  }
  func.func @transform_8(%arg0: i32) -> (i32, i32) {
    %c0_i32 = arith.constant 0 : i32
    %c0_i32_0 = arith.constant 0 : i32
    %c0_i32_1 = arith.constant 0 : i32
    return %c0_i32, %c0_i32_0 : i32, i32
  }
  func.func @transform_9(%arg0: i32) -> (i32, i32) {
    %c0_i32 = arith.constant 0 : i32
    %c0_i32_0 = arith.constant 0 : i32
    return %arg0, %c0_i32 : i32, i32
  }
}

</mosaic_0001>

<llo_original>
// kernel: tpu_custom_call.1
$region0: #{tpu_custom_call.1}
  #allocation0 [shape = 'u32[]', space=smem, size = 0x4, offset = 0x4, fixed_abs, tag = 'smem constant byte address 0x4 - core index']
  #allocation1 [shape = 'u32[144,128]{1,0:T(1,128)}', space=vmem, size = 0x12000, scoped, tag = 'internal scratch']
  %s0 = inlined_call_operand.hbm [shape: f32[8,8], index: 0, kind: input, shape index: {}]
  %s1 = inlined_call_operand.vmem [shape: bf16[8,128], index: 1, kind: input, shape index: {}]
  %s2 = inlined_call_operand.vmem [shape: f32[1,128], index: 2, kind: input, shape index: {}]
  %s3 = inlined_call_operand.vmem [shape: bf16[128,128], index: 3, kind: input, shape index: {}]
  %s4 = inlined_call_operand.vmem [shape: f32[1,128], index: 4, kind: input, shape index: {}]
  %s5 = inlined_call_operand.hbm [shape: bf16[128,128], index: 5, kind: input, shape index: {}]
  %s6 = inlined_call_operand.vmem [shape: f32[1,128], index: 6, kind: input, shape index: {}]
  %s7 = inlined_call_operand.vmem [shape: bf16[128,4], index: 7, kind: input, shape index: {}]
  %s8 = inlined_call_operand.vmem [shape: f32[1,4], index: 8, kind: input, shape index: {}]
  %s9 = inlined_call_operand.vmem [shape: f32[8,4], index: 9, kind: output, shape index: {}]
  %s10 = sld [smem:[#allocation0]]
  $region54: #{tpu_custom_call.1} parent=0
    _
  %s12 = ssub.s32 1, %s10
  %s13 = scalar_select 0, %s12, %s10
  $region1: #{tpu_custom_call.1} parent=0
    #allocation2 [shape = 'u8[4096]{0}', space=vmem, size = 0x1000, scoped, tag = 'input window, operand 0, single buffered']
    #allocation3 [shape = 's32[1]{0}', space=sflag, size = 0x4, scoped, tag = 'scoped memory for tpu_custom_call.1']
    #allocation4 [shape = 'u8[32768]{0}', space=vmem, size = 0x8000, scoped, tag = 'input window, operand 5, single buffered']
    #allocation5 [shape = 's32[1]{0}', space=sflag, size = 0x4, scoped, tag = 'scoped memory for tpu_custom_call.1']
    %14 = vsyncpa [#allocation3], 0
    %15 = vsyncpa [#allocation5], 0
    // Predicated region
    $region2: #{tpu_custom_call.1} parent=1 // pred_check
      _
    $region3: #{tpu_custom_call.1} parent=1 // pred_check_branch
      %17 = sbr.rel (0) target = $region5
    $region4: #{tpu_custom_call.1} parent=1 // pred_region
      %s19 = ssub.s32 128, 128
      %20 = vsyncadd [#allocation3], %s19
      %s22 = sshll.u32 [#allocation2], 4
      %s23 = int_to_ptr.vmem [resolvable:$true] %s22
      %25 = dma.hbm_to_vmem [thread:$0]  %s0, 128, %s23, [#allocation3]
    $region5: #{tpu_custom_call.1} parent=1 // pred_fallthru
      _
    // Predicated region
    $region6: #{tpu_custom_call.1} parent=1 // pred_check
      _
    $region7: #{tpu_custom_call.1} parent=1 // pred_check_branch
      %27 = sbr.rel (0) target = $region9
    $region8: #{tpu_custom_call.1} parent=1 // pred_region
      _
    $region9: #{tpu_custom_call.1} parent=1 // pred_fallthru
      _
    // Predicated region
    $region10: #{tpu_custom_call.1} parent=1 // pred_check
      _
    $region11: #{tpu_custom_call.1} parent=1 // pred_check_branch
      %29 = sbr.rel (0) target = $region13
    $region12: #{tpu_custom_call.1} parent=1 // pred_region
      _
    $region13: #{tpu_custom_call.1} parent=1 // pred_fallthru
      _
    // Predicated region
    $region14: #{tpu_custom_call.1} parent=1 // pred_check
      _
    $region15: #{tpu_custom_call.1} parent=1 // pred_check_branch
      %31 = sbr.rel (0) target = $region17
    $region16: #{tpu_custom_call.1} parent=1 // pred_region
      _
    $region17: #{tpu_custom_call.1} parent=1 // pred_fallthru
      _
    // Predicated region
    $region18: #{tpu_custom_call.1} parent=1 // pred_check
      _
    $region19: #{tpu_custom_call.1} parent=1 // pred_check_branch
      %33 = sbr.rel (0) target = $region21
    $region20: #{tpu_custom_call.1} parent=1 // pred_region
      _
    $region21: #{tpu_custom_call.1} parent=1 // pred_fallthru
      _
    // Predicated region
    $region22: #{tpu_custom_call.1} parent=1 // pred_check
      _
    $region23: #{tpu_custom_call.1} parent=1 // pred_check_branch
      %35 = sbr.rel (0) target = $region25
    $region24: #{tpu_custom_call.1} parent=1 // pred_region
      %s37 = ssub.s32 1024, 1024
      %38 = vsyncadd [#allocation5], %s37
      %s39 = sshll.u32 [#allocation4], 4
      %s40 = int_to_ptr.vmem [resolvable:$true] %s39
      %45 = dma.hbm_to_vmem [thread:$0]  %s5, 1024, %s40, [#allocation5], 64, 64, 4
    $region25: #{tpu_custom_call.1} parent=1 // pred_fallthru
      _
    // Predicated region
    $region26: #{tpu_custom_call.1} parent=1 // pred_check
      _
    $region27: #{tpu_custom_call.1} parent=1 // pred_check_branch
      %47 = sbr.rel (0) target = $region29
    $region28: #{tpu_custom_call.1} parent=1 // pred_region
      _
    $region29: #{tpu_custom_call.1} parent=1 // pred_fallthru
      _
    // Predicated region
    $region30: #{tpu_custom_call.1} parent=1 // pred_check
      _
    $region31: #{tpu_custom_call.1} parent=1 // pred_check_branch
      %49 = sbr.rel (0) target = $region33
    $region32: #{tpu_custom_call.1} parent=1 // pred_region
      _
    $region33: #{tpu_custom_call.1} parent=1 // pred_fallthru
      _
    // Predicated region
    $region34: #{tpu_custom_call.1} parent=1 // pred_check
      _
    $region35: #{tpu_custom_call.1} parent=1 // pred_check_branch
      %51 = sbr.rel (0) target = $region37
    $region36: #{tpu_custom_call.1} parent=1 // pred_region
      _
    $region37: #{tpu_custom_call.1} parent=1 // pred_fallthru
      _
    // Predicated region
    $region38: #{tpu_custom_call.1} parent=1 // pred_check
      _
    $region39: #{tpu_custom_call.1} parent=1 // pred_check_branch
      %53 = sbr.rel (0) target = $region41
    $region40: #{tpu_custom_call.1} parent=1 // pred_region
      %54 = dma.done [#allocation3], 128
    $region41: #{tpu_custom_call.1} parent=1 // pred_fallthru
      _
    // Predicated region
    $region42: #{tpu_custom_call.1} parent=1 // pred_check
      _
    $region43: #{tpu_custom_call.1} parent=1 // pred_check_branch
      %56 = sbr.rel (0) target = $region45
    $region44: #{tpu_custom_call.1} parent=1 // pred_region
      %57 = dma.done [#allocation5], 1024
    $region45: #{tpu_custom_call.1} parent=1 // pred_fallthru
      _
    %v59 = vld [vmem:[#allocation2] sm:$0xff]
    %v60 = vpack.c.bf16 %v59, %v59
    %v61 = vld [vmem:[%s1] sm:$0xf]
    %v62 = vld [vmem:[%s2] sm:$0x1]
    %v64 = vlaneseq
    %v65 = vshrl.u32 %v64, 7
    %v66 = vsub.s32 0, %v65
    %v67 = vrot.slane %v62, %v66
    %vm69 = vcmask 64512
    %v71 = vsel %vm69, %v60, 0
    %vm73 = vcmask 1043456
    %v75 = vsel %vm73, %v61, 0
    %77 = vmatprep.subr.bf16.mxu0 0
    %78 = vmatpush1.bf16.msra.mxu0 0
    %79 = vmatprep.subr.bf16.mxu0 0
    %80 = vmatpush1.bf16.msra.mxu0 0
    %81 = vmatprep.subr.bf16.mxu0 0
    %82 = vmatpush1.bf16.msra.mxu0 0
    %83 = vmatprep.subr.bf16.mxu0 0
    %84 = vmatpush1.bf16.msra.mxu0 0
    %85 = vmatprep.subr.bf16.mxu0 0
    %86 = vmatpush1.bf16.msra.mxu0 0
    %87 = vmatprep.subr.bf16.mxu0 0
    %88 = vmatpush1.bf16.msra.mxu0 0
    %89 = vmatprep.subr.bf16.mxu0 0
    %90 = vmatpush1.bf16.msra.mxu0 0
    %91 = vmatprep.subr.bf16.mxu0 0
    %92 = vmatpush1.bf16.msra.mxu0 %v75
    %93 = vmatprep.subr.bf16.mxu0 0
    %94 = vmatpush2.bf16.msra.mxu0 0
    %95 = vmatprep.subr.bf16.mxu0 0
    %96 = vmatpush2.bf16.msra.mxu0 0
    %97 = vmatprep.subr.bf16.mxu0 0
    %98 = vmatpush2.bf16.msra.mxu0 0
    %99 = vmatprep.subr.bf16.mxu0 0
    %100 = vmatpush2.bf16.msra.mxu0 0
    %101 = vmatprep.subr.bf16.mxu0 0
    %102 = vmatpush2.bf16.msra.mxu0 0
    %103 = vmatprep.subr.bf16.mxu0 0
    %104 = vmatpush2.bf16.msra.mxu0 0
    %105 = vmatprep.subr.bf16.mxu0 0
    %106 = vmatpush2.bf16.msra.mxu0 0
    %107 = vmatprep.subr.bf16.mxu0 0
    %108 = vmatpush2.bf16.msra.mxu0 0
    %109 = vmatprep.mubr.bf16.mxu0 0
    %110 = vmatmul.mubr.bf16.gmra.mxu0 %v71
    %v111 = vpop.f32.mrf.mxu0
    %v112 = vadd.f32 %v67, %v111
    %v113 = vpop.f32.mrf.mxu0
    %v114 = vpop.f32.mrf.mxu0
    %v115 = vpop.f32.mrf.mxu0
    %116 = vdwg.mxu0
    %v117 = vmax.f32 %v112, 0.0
    %v118 = vpack.c.bf16 %v117, %v117
    %v119 = vld [vmem:[%s3] sm:$0xf]
    %v120 = vld [vmem:[%s3 + $0x4] sm:$0xf]
    %v121 = vld [vmem:[%s3 + $0x8] sm:$0xf]
    %v122 = vld [vmem:[%s3 + $0xc] sm:$0xf]
    %v123 = vld [vmem:[%s3 + $0x10] sm:$0xf]
    %v124 = vld [vmem:[%s3 + $0x14] sm:$0xf]
    %v125 = vld [vmem:[%s3 + $0x18] sm:$0xf]
    %v126 = vld [vmem:[%s3 + $0x1c] sm:$0xf]
    %v127 = vld [vmem:[%s3 + $0x20] sm:$0xf]
    %v128 = vld [vmem:[%s3 + $0x24] sm:$0xf]
    %v129 = vld [vmem:[%s3 + $0x28] sm:$0xf]
    %v130 = vld [vmem:[%s3 + $0x2c] sm:$0xf]
    %v131 = vld [vmem:[%s3 + $0x30] sm:$0xf]
    %v132 = vld [vmem:[%s3 + $0x34] sm:$0xf]
    %v133 = vld [vmem:[%s3 + $0x38] sm:$0xf]
    %v134 = vld [vmem:[%s3 + $0x3c] sm:$0xf]
    %v135 = vld [vmem:[%s4] sm:$0x1]
    %v137 = vlaneseq
    %v138 = vshrl.u32 %v137, 7
    %v139 = vsub.s32 0, %v138
    %v140 = vrot.slane %v135, %v139
    %v158 = vunpack.c.l.b16 %v119
    %v159 = vunpack.c.l.b16 %v120
    %v160 = vunpack.c.l.b16 %v121
    %v161 = vunpack.c.l.b16 %v122
    %v162 = vunpack.c.l.b16 %v123
    %v163 = vunpack.c.l.b16 %v124
    %v164 = vunpack.c.l.b16 %v125
    %v165 = vunpack.c.l.b16 %v126
    %v166 = vunpack.c.l.b16 %v127
    %v167 = vunpack.c.l.b16 %v128
    %v168 = vunpack.c.l.b16 %v129
    %v169 = vunpack.c.l.b16 %v130
    %v170 = vunpack.c.l.b16 %v131
    %v171 = vunpack.c.l.b16 %v132
    %v172 = vunpack.c.l.b16 %v133
    %v173 = vunpack.c.l.b16 %v134
    %v174 = vpack.c.b16 %v159, %v158
    %v175 = vpack.c.b16 %v161, %v160
    %v176 = vpack.c.b16 %v163, %v162
    %v177 = vpack.c.b16 %v165, %v164
    %v178 = vpack.c.b16 %v167, %v166
    %v179 = vpack.c.b16 %v169, %v168
    %v180 = vpack.c.b16 %v171, %v170
    %v181 = vpack.c.b16 %v173, %v172
    %190 = vmatprep.subr.bf16.mxu0 0
    %191 = vmatpush1.bf16.msra.mxu0 %v181
    %192 = vmatprep.subr.bf16.mxu0 0
    %193 = vmatpush1.bf16.msra.mxu0 %v180
    %194 = vmatprep.subr.bf16.mxu0 0
    %195 = vmatpush1.bf16.msra.mxu0 %v179
    %196 = vmatprep.subr.bf16.mxu0 0
    %197 = vmatpush1.bf16.msra.mxu0 %v178
    %198 = vmatprep.subr.bf16.mxu0 0
    %199 = vmatpush1.bf16.msra.mxu0 %v177
    %200 = vmatprep.subr.bf16.mxu0 0
    %201 = vmatpush1.bf16.msra.mxu0 %v176
    %202 = vmatprep.subr.bf16.mxu0 0
    %203 = vmatpush1.bf16.msra.mxu0 %v175
    %204 = vmatprep.subr.bf16.mxu0 0
    %205 = vmatpush1.bf16.msra.mxu0 %v174
    %206 = vmatprep.subr.bf16.mxu0 0
    %207 = vmatpush2.bf16.msra.mxu0 0
    %208 = vmatprep.subr.bf16.mxu0 0
    %209 = vmatpush2.bf16.msra.mxu0 0
    %210 = vmatprep.subr.bf16.mxu0 0
    %211 = vmatpush2.bf16.msra.mxu0 0
    %212 = vmatprep.subr.bf16.mxu0 0
    %213 = vmatpush2.bf16.msra.mxu0 0
    %214 = vmatprep.subr.bf16.mxu0 0
    %215 = vmatpush2.bf16.msra.mxu0 0
    %216 = vmatprep.subr.bf16.mxu0 0
    %217 = vmatpush2.bf16.msra.mxu0 0
    %218 = vmatprep.subr.bf16.mxu0 0
    %219 = vmatpush2.bf16.msra.mxu0 0
    %220 = vmatprep.subr.bf16.mxu0 0
    %221 = vmatpush2.bf16.msra.mxu0 0
    %222 = vmatprep.mubr.bf16.mxu0 0
    %223 = vmatmul.mubr.bf16.gmra.mxu0 %v118
    %v224 = vpop.f32.mrf.mxu0
    %v225 = vadd.f32 %v140, %v224
    %v226 = vpop.f32.mrf.mxu0
    %v227 = vpop.f32.mrf.mxu0
    %v228 = vpop.f32.mrf.mxu0
    %229 = vdwg.mxu0
    %v230 = vmax.f32 %v225, 0.0
    %v231 = vpack.c.bf16 %v230, %v230
    %v232 = vld [vmem:[#allocation4] sm:$0xf]
    %v233 = vld [vmem:[#allocation4 + $0x4] sm:$0xf]
    %v234 = vld [vmem:[#allocation4 + $0x8] sm:$0xf]
    %v235 = vld [vmem:[#allocation4 + $0xc] sm:$0xf]
    %v236 = vld [vmem:[#allocation4 + $0x10] sm:$0xf]
    %v237 = vld [vmem:[#allocation4 + $0x14] sm:$0xf]
    %v238 = vld [vmem:[#allocation4 + $0x18] sm:$0xf]
    %v239 = vld [vmem:[#allocation4 + $0x1c] sm:$0xf]
    %v240 = vld [vmem:[#allocation4 + $0x20] sm:$0xf]
    %v241 = vld [vmem:[#allocation4 + $0x24] sm:$0xf]
    %v242 = vld [vmem:[#allocation4 + $0x28] sm:$0xf]
    %v243 = vld [vmem:[#allocation4 + $0x2c] sm:$0xf]
    %v244 = vld [vmem:[#allocation4 + $0x30] sm:$0xf]
    %v245 = vld [vmem:[#allocation4 + $0x34] sm:$0xf]
    %v246 = vld [vmem:[#allocation4 + $0x38] sm:$0xf]
    %v247 = vld [vmem:[#allocation4 + $0x3c] sm:$0xf]
    %v248 = vld [vmem:[%s6] sm:$0x1]
    %v250 = vlaneseq
    %v251 = vshrl.u32 %v250, 7
    %v252 = vsub.s32 0, %v251
    %v253 = vrot.slane %v248, %v252
    %v271 = vunpack.c.l.b16 %v232
    %v272 = vunpack.c.l.b16 %v233
    %v273 = vunpack.c.l.b16 %v234
    %v274 = vunpack.c.l.b16 %v235
    %v275 = vunpack.c.l.b16 %v236
    %v276 = vunpack.c.l.b16 %v237
    %v277 = vunpack.c.l.b16 %v238
    %v278 = vunpack.c.l.b16 %v239
    %v279 = vunpack.c.l.b16 %v240
    %v280 = vunpack.c.l.b16 %v241
    %v281 = vunpack.c.l.b16 %v242
    %v282 = vunpack.c.l.b16 %v243
    %v283 = vunpack.c.l.b16 %v244
    %v284 = vunpack.c.l.b16 %v245
    %v285 = vunpack.c.l.b16 %v246
    %v286 = vunpack.c.l.b16 %v247
    %v287 = vpack.c.b16 %v272, %v271
    %v288 = vpack.c.b16 %v274, %v273
    %v289 = vpack.c.b16 %v276, %v275
    %v290 = vpack.c.b16 %v278, %v277
    %v291 = vpack.c.b16 %v280, %v279
    %v292 = vpack.c.b16 %v282, %v281
    %v293 = vpack.c.b16 %v284, %v283
    %v294 = vpack.c.b16 %v286, %v285
    %303 = vmatprep.subr.bf16.mxu0 0
    %304 = vmatpush1.bf16.msra.mxu0 %v294
    %305 = vmatprep.subr.bf16.mxu0 0
    %306 = vmatpush1.bf16.msra.mxu0 %v293
    %307 = vmatprep.subr.bf16.mxu0 0
    %308 = vmatpush1.bf16.msra.mxu0 %v292
    %309 = vmatprep.subr.bf16.mxu0 0
    %310 = vmatpush1.bf16.msra.mxu0 %v291
    %311 = vmatprep.subr.bf16.mxu0 0
    %312 = vmatpush1.bf16.msra.mxu0 %v290
    %313 = vmatprep.subr.bf16.mxu0 0
    %314 = vmatpush1.bf16.msra.mxu0 %v289
    %315 = vmatprep.subr.bf16.mxu0 0
    %316 = vmatpush1.bf16.msra.mxu0 %v288
    %317 = vmatprep.subr.bf16.mxu0 0
    %318 = vmatpush1.bf16.msra.mxu0 %v287
    %319 = vmatprep.subr.bf16.mxu0 0
    %320 = vmatpush2.bf16.msra.mxu0 0
    %321 = vmatprep.subr.bf16.mxu0 0
    %322 = vmatpush2.bf16.msra.mxu0 0
    %323 = vmatprep.subr.bf16.mxu0 0
    %324 = vmatpush2.bf16.msra.mxu0 0
    %325 = vmatprep.subr.bf16.mxu0 0
    %326 = vmatpush2.bf16.msra.mxu0 0
    %327 = vmatprep.subr.bf16.mxu0 0
    %328 = vmatpush2.bf16.msra.mxu0 0
    %329 = vmatprep.subr.bf16.mxu0 0
    %330 = vmatpush2.bf16.msra.mxu0 0
    %331 = vmatprep.subr.bf16.mxu0 0
    %332 = vmatpush2.bf16.msra.mxu0 0
    %333 = vmatprep.subr.bf16.mxu0 0
    %334 = vmatpush2.bf16.msra.mxu0 0
    %335 = vmatprep.mubr.bf16.mxu0 0
    %336 = vmatmul.mubr.bf16.gmra.mxu0 %v231
    %v337 = vpop.f32.mrf.mxu0
    %v338 = vadd.f32 %v253, %v337
    %v339 = vpop.f32.mrf.mxu0
    %v340 = vpop.f32.mrf.mxu0
    %v341 = vpop.f32.mrf.mxu0
    %342 = vdwg.mxu0
    %v343 = vmax.f32 %v338, 0.0
    %v344 = vpack.c.bf16 %v343, %v343
    %v345 = vld [vmem:[%s7] sm:$0xf]
    %v346 = vld [vmem:[%s7 + $0x4] sm:$0xf]
    %v347 = vld [vmem:[%s7 + $0x8] sm:$0xf]
    %v348 = vld [vmem:[%s7 + $0xc] sm:$0xf]
    %v349 = vld [vmem:[%s7 + $0x10] sm:$0xf]
    %v350 = vld [vmem:[%s7 + $0x14] sm:$0xf]
    %v351 = vld [vmem:[%s7 + $0x18] sm:$0xf]
    %v352 = vld [vmem:[%s7 + $0x1c] sm:$0xf]
    %v353 = vld [vmem:[%s7 + $0x20] sm:$0xf]
    %v354 = vld [vmem:[%s7 + $0x24] sm:$0xf]
    %v355 = vld [vmem:[%s7 + $0x28] sm:$0xf]
    %v356 = vld [vmem:[%s7 + $0x2c] sm:$0xf]
    %v357 = vld [vmem:[%s7 + $0x30] sm:$0xf]
    %v358 = vld [vmem:[%s7 + $0x34] sm:$0xf]
    %v359 = vld [vmem:[%s7 + $0x38] sm:$0xf]
    %v360 = vld [vmem:[%s7 + $0x3c] sm:$0xf]
    %v361 = vld [vmem:[%s8] sm:$0x1]
    %v363 = vlaneseq
    %v364 = vshrl.u32 %v363, 7
    %v365 = vsub.s32 0, %v364
    %v366 = vrot.slane %v361, %v365
    %v384 = vunpack.c.l.b16 %v345
    %v385 = vunpack.c.l.b16 %v346
    %v386 = vunpack.c.l.b16 %v347
    %v387 = vunpack.c.l.b16 %v348
    %v388 = vunpack.c.l.b16 %v349
    %v389 = vunpack.c.l.b16 %v350
    %v390 = vunpack.c.l.b16 %v351
    %v391 = vunpack.c.l.b16 %v352
    %v392 = vunpack.c.l.b16 %v353
    %v393 = vunpack.c.l.b16 %v354
    %v394 = vunpack.c.l.b16 %v355
    %v395 = vunpack.c.l.b16 %v356
    %v396 = vunpack.c.l.b16 %v357
    %v397 = vunpack.c.l.b16 %v358
    %v398 = vunpack.c.l.b16 %v359
    %v399 = vunpack.c.l.b16 %v360
    %v400 = vpack.c.b16 %v385, %v384
    %v401 = vpack.c.b16 %v387, %v386
    %v402 = vpack.c.b16 %v389, %v388
    %v403 = vpack.c.b16 %v391, %v390
    %v404 = vpack.c.b16 %v393, %v392
    %v405 = vpack.c.b16 %v395, %v394
    %v406 = vpack.c.b16 %v397, %v396
    %v407 = vpack.c.b16 %v399, %v398
    %416 = vmatprep.subr.bf16.mxu0 0
    %417 = vmatpush1.bf16.msra.mxu0 %v407
    %418 = vmatprep.subr.bf16.mxu0 0
    %419 = vmatpush1.bf16.msra.mxu0 %v406
    %420 = vmatprep.subr.bf16.mxu0 0
    %421 = vmatpush1.bf16.msra.mxu0 %v405
    %422 = vmatprep.subr.bf16.mxu0 0
    %423 = vmatpush1.bf16.msra.mxu0 %v404
    %424 = vmatprep.subr.bf16.mxu0 0
    %425 = vmatpush1.bf16.msra.mxu0 %v403
    %426 = vmatprep.subr.bf16.mxu0 0
    %427 = vmatpush1.bf16.msra.mxu0 %v402
    %428 = vmatprep.subr.bf16.mxu0 0
    %429 = vmatpush1.bf16.msra.mxu0 %v401
    %430 = vmatprep.subr.bf16.mxu0 0
    %431 = vmatpush1.bf16.msra.mxu0 %v400
    %432 = vmatprep.subr.bf16.mxu0 0
    %433 = vmatpush2.bf16.msra.mxu0 0
    %434 = vmatprep.subr.bf16.mxu0 0
    %435 = vmatpush2.bf16.msra.mxu0 0
    %436 = vmatprep.subr.bf16.mxu0 0
    %437 = vmatpush2.bf16.msra.mxu0 0
    %438 = vmatprep.subr.bf16.mxu0 0
    %439 = vmatpush2.bf16.msra.mxu0 0
    %440 = vmatprep.subr.bf16.mxu0 0
    %441 = vmatpush2.bf16.msra.mxu0 0
    %442 = vmatprep.subr.bf16.mxu0 0
    %443 = vmatpush2.bf16.msra.mxu0 0
    %444 = vmatprep.subr.bf16.mxu0 0
    %445 = vmatpush2.bf16.msra.mxu0 0
    %446 = vmatprep.subr.bf16.mxu0 0
    %447 = vmatpush2.bf16.msra.mxu0 0
    %448 = vmatprep.mubr.bf16.mxu0 0
    %449 = vmatmul.mubr.bf16.gmra.mxu0 %v344
    %v450 = vpop.f32.mrf.mxu0
    %v451 = vadd.f32 %v366, %v450
    %v452 = vpop.f32.mrf.mxu0
    %v453 = vpop.f32.mrf.mxu0
    %v454 = vpop.f32.mrf.mxu0
    %455 = vdwg.mxu0
    %vm456 = vcmask 31744
    %457 = vst.msk [vmem:[%s9] sm:$0xff] %vm456, %v451
    // Predicated region
    $region46: #{tpu_custom_call.1} parent=1 // pred_check
      _
    $region47: #{tpu_custom_call.1} parent=1 // pred_check_branch
      %459 = sbr.rel (0) target = $region49
    $region48: #{tpu_custom_call.1} parent=1 // pred_region
      _
    $region49: #{tpu_custom_call.1} parent=1 // pred_fallthru
      _
    // Predicated region
    $region50: #{tpu_custom_call.1} parent=1 // pred_check
      _
    $region51: #{tpu_custom_call.1} parent=1 // pred_check_branch
      %461 = sbr.rel (0) target = $region53
    $region52: #{tpu_custom_call.1} parent=1 // pred_region
      _
    $region53: #{tpu_custom_call.1} parent=1 // pred_fallthru
      _
    %462 = vsyncpa [#allocation3], 1
    %463 = vsyncpa [#allocation5], 1

</llo_original>
